<compile_context>
chip_gen: v7x
topology: tpu7x:2x2x1
jax: 0.10.0
libtpu: 0.0.40
codegen_flags: <defaults>
</compile_context>

<pallas_src>
import functools

import numpy as np
import jax
import jax.numpy as jnp
from jax.experimental import pallas as pl
from jax.experimental.pallas import tpu as pltpu

BN_EPS = 1e-5
_NEG_BIG = -1e30  # finite "minus infinity" for masked max / masked exp


def _round_up(n, m):
    return ((n + m - 1) // m) * m


def _vmem_capacity_bytes():
    """Physical VMEM per core (v5e/v6e: 128 MiB, v7x: 64 MiB); conservative fallback."""
    try:
        info = pltpu.get_tpu_info()
        for attr in ("vmem_capacity_bytes", "vmem_bytes", "vmem_size_bytes"):
            v = getattr(info, attr, None)
            if v:
                return int(v)
    except Exception:
        pass
    return 64 * 1024 * 1024


# ---------------------------------------------------------------------------
# In-kernel helpers
# ---------------------------------------------------------------------------

def _stats_selector(n_rows, row_offset, n_valid):
    """[2, 2*n_rows] f32 selector S so that S @ concat([h, h*h], axis=0) yields
    row 0 = sum(h) and row 1 = sum(h*h) over VALID batch rows in ONE MXU matmul.
    Padded rows (global index >= n_valid) contribute zero."""
    col = jax.lax.broadcasted_iota(jnp.int32, (2, 2 * n_rows), 1)
    row = jax.lax.broadcasted_iota(jnp.int32, (2, 2 * n_rows), 0)
    in_first = col < n_rows
    local = jnp.where(in_first, col, col - n_rows)
    valid = (local + row_offset) < n_valid
    pick = jnp.logical_xor(row != 0, in_first)   # (row0, first half) | (row1, second half)
    return jnp.where(jnp.logical_and(pick, valid), 1.0, 0.0).astype(jnp.float32)


def _batch_stats(h, sel):
    """One-matmul (sum, sum_sq) over valid batch rows -> [2, F] f32."""
    hh = jnp.concatenate([h, h * h], axis=0)     # sublane concat (rows % 8 == 0)
    return jnp.dot(sel, hh, preferred_element_type=jnp.float32)


def _bn_scale_shift(stats, gamma, beta, n_valid):
    """BatchNorm1d (training) affine fold: y = h*scale + shift (f32)."""
    inv_n = jnp.float32(1.0 / n_valid)
    mu = stats[0:1, :] * inv_n
    var = jnp.maximum(stats[1:2, :] * inv_n - mu * mu, 0.0)   # biased variance
    scale = gamma * jax.lax.rsqrt(var + BN_EPS)
    shift = beta - mu * scale
    return scale, shift


def _segmented_softmax(data, grp, cat_sum):
    """Per-categorical-group softmax over the first cat_sum lanes of data
    ([B, OUT_PAD] f32); remaining lanes pass through unchanged."""
    f32 = jnp.float32
    out_pad = data.shape[1]
    col = jax.lax.broadcasted_iota(jnp.int32, (1, out_pad), 1)
    cat_mask = col < cat_sum
    # Per-row max over all categorical columns (softmax is shift-invariant per row).
    row_max = jnp.max(jnp.where(cat_mask, data, f32(_NEG_BIG)), axis=1, keepdims=True)
    e = jnp.exp(jnp.where(cat_mask, data - row_max, f32(_NEG_BIG)))  # 0 outside cat cols
    # Group denominators broadcast back to every column via one 0/1 same-group matmul.
    denom = jnp.dot(e.astype(grp.dtype), grp, preferred_element_type=f32)
    denom = jnp.where(cat_mask, jnp.maximum(denom, 1e-30), 1.0)
    r = pl.reciprocal(denom, approx=True)
    r = r * (2.0 - denom * r)          # one Newton step -> ~f32-exact normalization
    return jnp.where(cat_mask, e * r, data)


# ---------------------------------------------------------------------------
# Fused single-call kernel (batch resident in VMEM)
# ---------------------------------------------------------------------------

def _fused_kernel(x_ref, w1_ref, b1_ref, g1_ref, be1_ref,
                  w2_ref, b2_ref, g2_ref, be2_ref,
                  w3_ref, b3_ref, grp_ref, out_ref,
                  *, cat_sum, batch, matmul_dtype):
    md = matmul_dtype
    f32 = jnp.float32
    bp = x_ref.shape[0]                         # padded batch (multiple of 8)
    sel = _stats_selector(bp, 0, batch)         # shared by both BN layers

    # ---- Linear(4k -> 2k) + ReLU (MXU, f32 accumulate) ----
    h1 = jnp.dot(x_ref[...].astype(md), w1_ref[...], preferred_element_type=f32) + b1_ref[...]
    h1 = jnp.maximum(h1, 0.0)

    # ---- BN1: one-matmul stats; scale/shift applied directly in f32 ----
    sc1, sh1 = _bn_scale_shift(_batch_stats(h1, sel), g1_ref[...], be1_ref[...], batch)
    h1 = h1 * sc1 + sh1

    # ---- Linear(2k -> k) + ReLU ----
    h2 = jnp.dot(h1.astype(md), w2_ref[...], preferred_element_type=f32) + b2_ref[...]
    h2 = jnp.maximum(h2, 0.0)

    # ---- BN2 ----
    sc2, sh2 = _bn_scale_shift(_batch_stats(h2, sel), g2_ref[...], be2_ref[...], batch)
    h2 = h2 * sc2 + sh2

    # ---- Linear(k -> dim_last), lane-padded to OUT_PAD, segmented softmax ----
    data = jnp.dot(h2.astype(md), w3_ref[...], preferred_element_type=f32) + b3_ref[...]
    out_ref[...] = _segmented_softmax(data, grp_ref[...], cat_sum)


# ---------------------------------------------------------------------------
# Batch-tiled 3-pass pipeline (for batches that do not fit VMEM)
# ---------------------------------------------------------------------------

def _pass1_kernel(x_ref, w_ref, b_ref, h_ref, stats_ref, *, batch, tile, matmul_dtype):
    f32 = jnp.float32
    i = pl.program_id(0)

    @pl.when(i == 0)
    def _init():
        stats_ref[...] = jnp.zeros_like(stats_ref)

    h = jnp.dot(x_ref[...].astype(matmul_dtype), w_ref[...],
                preferred_element_type=f32) + b_ref[...]
    h = jnp.maximum(h, 0.0)
    h_ref[...] = h.astype(h_ref.dtype)
    sel = _stats_selector(tile, i * tile, batch)     # masks padded rows
    stats_ref[...] += _batch_stats(h, sel)


def _pass2_kernel(h_in_ref, sc_ref, sh_ref, w_ref, b_ref, h_ref, stats_ref,
                  *, batch, tile, matmul_dtype):
    f32 = jnp.float32
    i = pl.program_id(0)

    @pl.when(i == 0)
    def _init():
        stats_ref[...] = jnp.zeros_like(stats_ref)

    hbn = h_in_ref[...].astype(f32) * sc_ref[...] + sh_ref[...]     # BN apply in f32
    h = jnp.dot(hbn.astype(matmul_dtype), w_ref[...],
                preferred_element_type=f32) + b_ref[...]
    h = jnp.maximum(h, 0.0)
    h_ref[...] = h.astype(h_ref.dtype)
    sel = _stats_selector(tile, i * tile, batch)
    stats_ref[...] += _batch_stats(h, sel)


def _pass3_kernel(h_in_ref, sc_ref, sh_ref, w_ref, b_ref, grp_ref, out_ref,
                  *, cat_sum, matmul_dtype):
    f32 = jnp.float32
    hbn = h_in_ref[...].astype(f32) * sc_ref[...] + sh_ref[...]
    data = jnp.dot(hbn.astype(matmul_dtype), w_ref[...],
                   preferred_element_type=f32) + b_ref[...]
    out_ref[...] = _segmented_softmax(data, grp_ref[...], cat_sum)


def _host_bn_scale_shift(stats, gamma, beta, n):
    """Tiny [1,F] wrapper-side math between the tiled passes."""
    mu = stats[0:1, :] / n
    var = jnp.maximum(stats[1:2, :] / n - mu * mu, 0.0)
    scale = gamma * jax.lax.rsqrt(var + BN_EPS)
    shift = beta - mu * scale
    return scale, shift


def _tiled_forward(x, batch, batch_tile, prep, cat_sum, out_pad, md):
    (w1c, b1, g1, be1, w2c, b2, g2, be2, w3c, b3p, grp) = prep
    f32 = jnp.float32
    k4, f1 = w1c.shape
    f2 = w2c.shape[1]

    tb = max(8, (min(batch_tile, _round_up(batch, 8)) // 8) * 8)
    bp = _round_up(batch, tb)
    nt = bp // tb
    x_p = x if bp == batch else jnp.pad(x, ((0, bp - batch), (0, 0)))

    def res_spec(shape):                      # resident operand (weights, stats, scales)
        return pl.BlockSpec(shape, lambda i: (0, 0))

    def row_spec(feat):                       # batch-tiled operand
        return pl.BlockSpec((tb, feat), lambda i: (i, 0))

    arb = pltpu.CompilerParams(dimension_semantics=("arbitrary",))
    par = pltpu.CompilerParams(dimension_semantics=("parallel",))

    # ---- pass 1: Linear1 + ReLU -> h1 (streamed to HBM) + BN1 stats accumulator ----
    h1, st1 = pl.pallas_call(
        functools.partial(_pass1_kernel, batch=batch, tile=tb, matmul_dtype=md),
        grid=(nt,),
        in_specs=[row_spec(k4), res_spec((k4, f1)), res_spec((1, f1))],
        out_specs=(row_spec(f1), res_spec((2, f1))),
        out_shape=(jax.ShapeDtypeStruct((bp, f1), md),
                   jax.ShapeDtypeStruct((2, f1), f32)),
        compiler_params=arb,
    )(x_p, w1c, b1)
    sc1, sh1 = _host_bn_scale_shift(st1, g1, be1, batch)

    # ---- pass 2: BN1 apply + Linear2 + ReLU -> h2 + BN2 stats accumulator ----
    h2, st2 = pl.pallas_call(
        functools.partial(_pass2_kernel, batch=batch, tile=tb, matmul_dtype=md),
        grid=(nt,),
        in_specs=[row_spec(f1), res_spec((1, f1)), res_spec((1, f1)),
                  res_spec((f1, f2)), res_spec((1, f2))],
        out_specs=(row_spec(f2), res_spec((2, f2))),
        out_shape=(jax.ShapeDtypeStruct((bp, f2), md),
                   jax.ShapeDtypeStruct((2, f2), f32)),
        compiler_params=arb,
    )(h1, sc1, sh1, w2c, b2)
    sc2, sh2 = _host_bn_scale_shift(st2, g2, be2, batch)

    # ---- pass 3: BN2 apply + Linear3 + softmax ("parallel" -> both TCs on v7x) ----
    out = pl.pallas_call(
        functools.partial(_pass3_kernel, cat_sum=cat_sum, matmul_dtype=md),
        grid=(nt,),
        in_specs=[row_spec(f2), res_spec((1, f2)), res_spec((1, f2)),
                  res_spec((f2, out_pad)), res_spec((1, out_pad)),
                  res_spec((out_pad, out_pad))],
        out_specs=row_spec(out_pad),
        out_shape=jax.ShapeDtypeStruct((bp, out_pad), f32),
        compiler_params=par,
    )(h2, sc2, sh2, w3c, b3p, grp)
    return out


# ---------------------------------------------------------------------------
# Public wrapper
# ---------------------------------------------------------------------------

def generator_tabular_forward(x, params, cat_dims, dim_num,
                              matmul_dtype=jnp.bfloat16,
                              batch_tile=512, force_tiled=False):
    """Forward of Generator_Tabular.
    x: [B, 4k] (f32 or bf16 -- generate latents in bf16 when matmul_dtype=bf16 to
    halve the input DMA).  params = (w1,b1,g1,be1,w2,b2,g2,be2,w3,b3) with weights
    [in, out] and biases/gamma/beta [1, out].  Returns (x_num, x_cat) as float32."""
    w1, b1, g1, be1, w2, b2, g2, be2, w3, b3 = params
    f32 = jnp.float32
    md = matmul_dtype
    md_bytes = jnp.dtype(md).itemsize

    B = x.shape[0]
    k4, f1 = w1.shape          # 4k, 2k
    f2 = w2.shape[1]           # k
    cat_dims = tuple(int(d) for d in cat_dims)
    cat_sum = int(sum(cat_dims))
    dim_last = cat_sum + int(dim_num)
    out_pad = _round_up(dim_last, 128)     # lane-dense output width

    # ---- parameter prep (weights in MXU dtype; biases/gamma/beta stay f32) ----
    w1c = w1.astype(md)
    w2c = w2.astype(md)
    w3c = jnp.zeros((f2, out_pad), md).at[:, :dim_last].set(w3.astype(md))
    b3p = jnp.zeros((1, out_pad), f32).at[:, :dim_last].set(b3.astype(f32))
    b1 = b1.astype(f32); b2 = b2.astype(f32)
    g1 = g1.astype(f32); be1 = be1.astype(f32)
    g2 = g2.astype(f32); be2 = be2.astype(f32)

    # Static 0/1 "same categorical group" matrix (block-diagonal on the cat columns);
    # stored in the matmul dtype (0/1 is exact in bf16) -> full-rate denom matmul.
    grp_np = np.zeros((out_pad, out_pad), np.float32)
    j = 0
    for dc in cat_dims:
        grp_np[j:j + dc, j:j + dc] = 1.0
        j += dc
    grp = jnp.asarray(grp_np, dtype=md)

    # ---- path selection: fused single call while the batch fits VMEM (limit raised
    #      via vmem_limit_bytes), else the batch-tiled 3-pass pipeline ----
    vmem_cap = _vmem_capacity_bytes()
    bp8 = _round_up(B, 8)
    row_bytes = (k4 * md_bytes
                 + f1 * (3 * 4 + md_bytes)
                 + f2 * (3 * 4 + md_bytes)
                 + out_pad * (3 * 4 + md_bytes))
    weight_bytes = (k4 * f1 + f1 * f2 + f2 * out_pad + out_pad * out_pad) * md_bytes
    fused_bytes = bp8 * row_bytes + weight_bytes + (2 << 20)
    use_tiled = force_tiled or fused_bytes > int(0.8 * vmem_cap)

    if not use_tiled:
        x_p = x if bp8 == B else jnp.pad(x, ((0, bp8 - B), (0, 0)))
        kernel = functools.partial(_fused_kernel, cat_sum=cat_sum, batch=B,
                                   matmul_dtype=md)
        vmem = pl.BlockSpec(memory_space=pltpu.MemorySpace.VMEM)
        vmem_limit = int(min(0.9 * vmem_cap, max(fused_bytes + (8 << 20), 32 << 20)))
        # NOTE: output kept as one lane-dense f32 slab; for bandwidth-critical large-B
        # deployments a bf16 output slab would halve writeback at reduced precision.
        out = pl.pallas_call(
            kernel,
            out_shape=jax.ShapeDtypeStruct((bp8, out_pad), f32),
            in_specs=[vmem] * 12,
            out_specs=vmem,
            compiler_params=pltpu.CompilerParams(vmem_limit_bytes=vmem_limit),
        )(x_p, w1c, b1, g1, be1, w2c, b2, g2, be2, w3c, b3p, grp)
    else:
        out = _tiled_forward(x, B, batch_tile,
                             (w1c, b1, g1, be1, w2c, b2, g2, be2, w3c, b3p, grp),
                             cat_sum, out_pad, md)

    x_cat = out[:B, :cat_sum]
    x_num = out[:B, cat_sum:dim_last]
    return x_num, x_cat


# ---------------------------------------------------------------------------
# Pure-JAX reference (mirrors the PyTorch module in training mode)
# ---------------------------------------------------------------------------

def _reference_forward(x, params, cat_dims, dim_num):
    (w1, b1, g1, be1, w2, b2, g2, be2, w3, b3) = params
    h = jnp.maximum(x @ w1 + b1, 0.0)
    mu = jnp.mean(h, axis=0, keepdims=True)
    var = jnp.mean((h - mu) ** 2, axis=0, keepdims=True)
    h = (h - mu) / jnp.sqrt(var + BN_EPS) * g1 + be1
    h = jnp.maximum(h @ w2 + b2, 0.0)
    mu = jnp.mean(h, axis=0, keepdims=True)
    var = jnp.mean((h - mu) ** 2, axis=0, keepdims=True)
    h = (h - mu) / jnp.sqrt(var + BN_EPS) * g2 + be2
    data = h @ w3 + b3
    cat_sum = int(sum(cat_dims))
    segs, j = [], 0
    for dc in cat_dims:
        segs.append(jax.nn.softmax(data[:, j:j + dc], axis=1))
        j += dc
    x_cat = jnp.concatenate(segs, axis=1)
    x_num = data[:, cat_sum:]
    return x_num, x_cat


if __name__ == "__main__":
    k = 32
    dim_data_cat_list = [3, 4, 5]   # categorical cardinalities
    dim_data_num = 4                # numerical columns
    dim_last = sum(dim_data_cat_list) + dim_data_num  # 16
    B = 32

    key = jax.random.PRNGKey(0)
    ks = jax.random.split(key, 8)

    w1 = jax.random.normal(ks[0], (k * 4, k * 2), jnp.float32) * 0.1
    b1 = jax.random.normal(ks[1], (1, k * 2), jnp.float32) * 0.1
    g1 = jnp.ones((1, k * 2), jnp.float32)
    be1 = jnp.zeros((1, k * 2), jnp.float32)
    w2 = jax.random.normal(ks[2], (k * 2, k), jnp.float32) * 0.1
    b2 = jax.random.normal(ks[3], (1, k), jnp.float32) * 0.1
    g2 = jnp.ones((1, k), jnp.float32)
    be2 = jnp.zeros((1, k), jnp.float32)
    w3 = jax.random.normal(ks[4], (k, dim_last), jnp.float32) * 0.1
    b3 = jax.random.normal(ks[5], (1, dim_last), jnp.float32) * 0.1
    params = (w1, b1, g1, be1, w2, b2, g2, be2, w3, b3)

    # Latent input (equivalent of sample_latent): [B, k*4]
    x = jax.random.normal(ks[6], (B, k * 4), jnp.float32)
    ref_num, ref_cat = _reference_forward(x, params, dim_data_cat_list, dim_data_num)

    # ---- fused single-call path, f32 MXU operands (tight check) ----
    x_num, x_cat = generator_tabular_forward(x, params, dim_data_cat_list, dim_data_num,
                                             matmul_dtype=jnp.float32)
    jax.block_until_ready((x_num, x_cat))
    assert x_num.shape == (B, dim_data_num)
    assert x_cat.shape == (B, sum(dim_data_cat_list))
    assert jnp.allclose(x_num, ref_num, atol=2e-3, rtol=2e-3)
    assert jnp.allclose(x_cat, ref_cat, atol=2e-3, rtol=2e-3)
    j = 0
    for dc in dim_data_cat_list:
        assert jnp.allclose(jnp.sum(x_cat[:, j:j + dc], axis=1), 1.0, atol=2e-3)
        j += dc

    # ---- fused path, default bf16 MXU operands (all generations); latent in bf16 ----
    xb_num, xb_cat = generator_tabular_forward(x.astype(jnp.bfloat16), params,
                                               dim_data_cat_list, dim_data_num)
    jax.block_until_ready((xb_num, xb_cat))
    assert jnp.allclose(xb_num, ref_num, atol=6e-2, rtol=6e-2)
    assert jnp.allclose(xb_cat, ref_cat, atol=6e-2, rtol=6e-2)
    j = 0
    for dc in dim_data_cat_list:
        assert jnp.allclose(jnp.sum(xb_cat[:, j:j + dc], axis=1), 1.0, atol=2e-2)
        j += dc

    # ---- batch-tiled 3-pass path (forced; normally used when the batch exceeds the
    #      per-generation VMEM budget).  B not a multiple of the tile to exercise the
    #      padded-row masking of the BatchNorm statistics.  f32 operands, tight check.
    B2 = 320
    x2 = jax.random.normal(ks[7], (B2, k * 4), jnp.float32)
    ref_num2, ref_cat2 = _reference_forward(x2, params, dim_data_cat_list, dim_data_num)
    t_num, t_cat = generator_tabular_forward(x2, params, dim_data_cat_list, dim_data_num,
                                             matmul_dtype=jnp.float32,
                                             batch_tile=128, force_tiled=True)
    jax.block_until_ready((t_num, t_cat))
    assert jnp.allclose(t_num, ref_num2, atol=2e-3, rtol=2e-3)
    assert jnp.allclose(t_cat, ref_cat2, atol=2e-3, rtol=2e-3)

    # ---- batch-tiled path with default bf16 operands (production config) ----
    tb_num, tb_cat = generator_tabular_forward(x2.astype(jnp.bfloat16), params,
                                               dim_data_cat_list, dim_data_num,
                                               batch_tile=128, force_tiled=True)
    jax.block_until_ready((tb_num, tb_cat))
    assert jnp.allclose(tb_num, ref_num2, atol=6e-2, rtol=6e-2)
    assert jnp.allclose(tb_cat, ref_cat2, atol=6e-2, rtol=6e-2)

    print("KERNEL_OK")
</pallas_src>

<mosaic_0001>
module attributes {stable_mosaic.version = 11 : i64} {
  func.func @_fused_kernel(%arg0: memref<32x128xf32, #tpu.memory_space<vmem>>, %arg1: memref<128x64xf32, #tpu.memory_space<vmem>>, %arg2: memref<1x64xf32, #tpu.memory_space<vmem>>, %arg3: memref<1x64xf32, #tpu.memory_space<vmem>>, %arg4: memref<1x64xf32, #tpu.memory_space<vmem>>, %arg5: memref<64x32xf32, #tpu.memory_space<vmem>>, %arg6: memref<1x32xf32, #tpu.memory_space<vmem>>, %arg7: memref<1x32xf32, #tpu.memory_space<vmem>>, %arg8: memref<1x32xf32, #tpu.memory_space<vmem>>, %arg9: memref<32x128xf32, #tpu.memory_space<vmem>>, %arg10: memref<1x128xf32, #tpu.memory_space<vmem>>, %arg11: memref<128x128xf32, #tpu.memory_space<vmem>>, %arg12: memref<32x128xf32, #tpu.memory_space<vmem>>) attributes {dimension_semantics = [], scalar_prefetch = 0 : i64, scratch_operands = 0 : i64, tpu.core_type = #tpu.core_type<tc>} {
    %0 = tpu.iota {dimensions = array<i32: 1>} : vector<2x64xi32>
    %1 = tpu.iota {dimensions = array<i32: 0>} : vector<2x64xi32>
    %c32_i32 = arith.constant 32 : i32
    %2 = vector.broadcast %c32_i32 : i32 to vector<2x64xi32>
    %3 = arith.cmpi slt, %0, %2 : vector<2x64xi32>
    %c32_i32_0 = arith.constant 32 : i32
    %4 = vector.broadcast %c32_i32_0 : i32 to vector<2x64xi32>
    %5 = arith.subi %0, %4 : vector<2x64xi32>
    %6 = arith.select %3, %0, %5 : vector<2x64xi1>, vector<2x64xi32>
    %c0_i32 = arith.constant 0 : i32
    %7 = vector.broadcast %c0_i32 : i32 to vector<2x64xi32>
    %8 = arith.addi %6, %7 : vector<2x64xi32>
    %c32_i32_1 = arith.constant 32 : i32
    %9 = vector.broadcast %c32_i32_1 : i32 to vector<2x64xi32>
    %10 = arith.cmpi slt, %8, %9 : vector<2x64xi32>
    %c0_i32_2 = arith.constant 0 : i32
    %11 = vector.broadcast %c0_i32_2 : i32 to vector<2x64xi32>
    %12 = arith.cmpi ne, %1, %11 : vector<2x64xi32>
    %13 = arith.xori %12, %3 : vector<2x64xi1>
    %14 = arith.andi %13, %10 : vector<2x64xi1>
    %cst = arith.constant 1.000000e+00 : f32
    %cst_3 = arith.constant 0.000000e+00 : f32
    %15 = vector.broadcast %cst : f32 to vector<2x64xf32>
    %16 = vector.broadcast %cst_3 : f32 to vector<2x64xf32>
    %17 = arith.select %14, %15, %16 : vector<2x64xi1>, vector<2x64xf32>
    %c0 = arith.constant 0 : index
    %c0_4 = arith.constant 0 : index
    %18 = vector.load %arg0[%c0, %c0_4] : memref<32x128xf32, #tpu.memory_space<vmem>>, vector<32x128xf32>
    %c0_5 = arith.constant 0 : index
    %c0_6 = arith.constant 0 : index
    %19 = vector.load %arg1[%c0_5, %c0_6] : memref<128x64xf32, #tpu.memory_space<vmem>>, vector<128x64xf32>
    %cst_7 = arith.constant dense<0.000000e+00> : vector<32x64xf32>
    %20 = tpu.matmul %18, %19, %cst_7 {dimension_numbers = #tpu.dot_dimension_numbers<[1], [0], [0], [1], [0, 0, 1, 1], [], []>} : vector<32x128xf32>, vector<128x64xf32>, vector<32x64xf32> -> vector<32x64xf32>
    %c0_8 = arith.constant 0 : index
    %c0_9 = arith.constant 0 : index
    %21 = vector.load %arg2[%c0_8, %c0_9] : memref<1x64xf32, #tpu.memory_space<vmem>>, vector<1x64xf32>
    %22 = vector.broadcast %21 : vector<1x64xf32> to vector<32x64xf32>
    %23 = arith.addf %20, %22 : vector<32x64xf32>
    %cst_10 = arith.constant 0.000000e+00 : f32
    %24 = vector.broadcast %cst_10 : f32 to vector<32x64xf32>
    %25 = arith.maximumf %23, %24 : vector<32x64xf32>
    %26 = arith.mulf %25, %25 : vector<32x64xf32>
    %27 = tpu.concatenate %25, %26 in 0 : vector<32x64xf32>, vector<32x64xf32> -> vector<64x64xf32>
    %cst_11 = arith.constant dense<0.000000e+00> : vector<2x64xf32>
    %28 = tpu.matmul %17, %27, %cst_11 {dimension_numbers = #tpu.dot_dimension_numbers<[1], [0], [0], [1], [0, 0, 1, 1], [], []>} : vector<2x64xf32>, vector<64x64xf32>, vector<2x64xf32> -> vector<2x64xf32>
    %c0_12 = arith.constant 0 : index
    %c0_13 = arith.constant 0 : index
    %29 = vector.load %arg3[%c0_12, %c0_13] : memref<1x64xf32, #tpu.memory_space<vmem>>, vector<1x64xf32>
    %c0_14 = arith.constant 0 : index
    %c0_15 = arith.constant 0 : index
    %30 = vector.load %arg4[%c0_14, %c0_15] : memref<1x64xf32, #tpu.memory_space<vmem>>, vector<1x64xf32>
    %31 = vector.extract_strided_slice %28 {offsets = [0, 0], sizes = [1, 64], strides = [1, 1]} : vector<2x64xf32> to vector<1x64xf32>
    %cst_16 = arith.constant 3.125000e-02 : f32
    %32 = vector.broadcast %cst_16 : f32 to vector<1x64xf32>
    %33 = arith.mulf %31, %32 : vector<1x64xf32>
    %34 = vector.extract_strided_slice %28 {offsets = [1, 0], sizes = [1, 64], strides = [1, 1]} : vector<2x64xf32> to vector<1x64xf32>
    %cst_17 = arith.constant 3.125000e-02 : f32
    %35 = vector.broadcast %cst_17 : f32 to vector<1x64xf32>
    %36 = arith.mulf %34, %35 : vector<1x64xf32>
    %37 = arith.mulf %33, %33 : vector<1x64xf32>
    %38 = arith.subf %36, %37 : vector<1x64xf32>
    %cst_18 = arith.constant 0.000000e+00 : f32
    %39 = vector.broadcast %cst_18 : f32 to vector<1x64xf32>
    %40 = arith.maximumf %38, %39 : vector<1x64xf32>
    %cst_19 = arith.constant 9.99999974E-6 : f32
    %41 = vector.broadcast %cst_19 : f32 to vector<1x64xf32>
    %42 = arith.addf %40, %41 : vector<1x64xf32>
    %43 = math.rsqrt %42 : vector<1x64xf32>
    %44 = arith.mulf %29, %43 : vector<1x64xf32>
    %45 = arith.mulf %33, %44 : vector<1x64xf32>
    %46 = arith.subf %30, %45 : vector<1x64xf32>
    %47 = vector.broadcast %44 : vector<1x64xf32> to vector<32x64xf32>
    %48 = arith.mulf %25, %47 : vector<32x64xf32>
    %49 = vector.broadcast %46 : vector<1x64xf32> to vector<32x64xf32>
    %50 = arith.addf %48, %49 : vector<32x64xf32>
    %c0_20 = arith.constant 0 : index
    %c0_21 = arith.constant 0 : index
    %51 = vector.load %arg5[%c0_20, %c0_21] : memref<64x32xf32, #tpu.memory_space<vmem>>, vector<64x32xf32>
    %cst_22 = arith.constant dense<0.000000e+00> : vector<32x32xf32>
    %52 = tpu.matmul %50, %51, %cst_22 {dimension_numbers = #tpu.dot_dimension_numbers<[1], [0], [0], [1], [0, 0, 1, 1], [], []>} : vector<32x64xf32>, vector<64x32xf32>, vector<32x32xf32> -> vector<32x32xf32>
    %c0_23 = arith.constant 0 : index
    %c0_24 = arith.constant 0 : index
    %53 = vector.load %arg6[%c0_23, %c0_24] : memref<1x32xf32, #tpu.memory_space<vmem>>, vector<1x32xf32>
    %54 = vector.broadcast %53 : vector<1x32xf32> to vector<32x32xf32>
    %55 = arith.addf %52, %54 : vector<32x32xf32>
    %cst_25 = arith.constant 0.000000e+00 : f32
    %56 = vector.broadcast %cst_25 : f32 to vector<32x32xf32>
    %57 = arith.maximumf %55, %56 : vector<32x32xf32>
    %58 = arith.mulf %57, %57 : vector<32x32xf32>
    %59 = tpu.concatenate %57, %58 in 0 : vector<32x32xf32>, vector<32x32xf32> -> vector<64x32xf32>
    %cst_26 = arith.constant dense<0.000000e+00> : vector<2x32xf32>
    %60 = tpu.matmul %17, %59, %cst_26 {dimension_numbers = #tpu.dot_dimension_numbers<[1], [0], [0], [1], [0, 0, 1, 1], [], []>} : vector<2x64xf32>, vector<64x32xf32>, vector<2x32xf32> -> vector<2x32xf32>
    %c0_27 = arith.constant 0 : index
    %c0_28 = arith.constant 0 : index
    %61 = vector.load %arg7[%c0_27, %c0_28] : memref<1x32xf32, #tpu.memory_space<vmem>>, vector<1x32xf32>
    %c0_29 = arith.constant 0 : index
    %c0_30 = arith.constant 0 : index
    %62 = vector.load %arg8[%c0_29, %c0_30] : memref<1x32xf32, #tpu.memory_space<vmem>>, vector<1x32xf32>
    %63 = vector.extract_strided_slice %60 {offsets = [0, 0], sizes = [1, 32], strides = [1, 1]} : vector<2x32xf32> to vector<1x32xf32>
    %cst_31 = arith.constant 3.125000e-02 : f32
    %64 = vector.broadcast %cst_31 : f32 to vector<1x32xf32>
    %65 = arith.mulf %63, %64 : vector<1x32xf32>
    %66 = vector.extract_strided_slice %60 {offsets = [1, 0], sizes = [1, 32], strides = [1, 1]} : vector<2x32xf32> to vector<1x32xf32>
    %cst_32 = arith.constant 3.125000e-02 : f32
    %67 = vector.broadcast %cst_32 : f32 to vector<1x32xf32>
    %68 = arith.mulf %66, %67 : vector<1x32xf32>
    %69 = arith.mulf %65, %65 : vector<1x32xf32>
    %70 = arith.subf %68, %69 : vector<1x32xf32>
    %cst_33 = arith.constant 0.000000e+00 : f32
    %71 = vector.broadcast %cst_33 : f32 to vector<1x32xf32>
    %72 = arith.maximumf %70, %71 : vector<1x32xf32>
    %cst_34 = arith.constant 9.99999974E-6 : f32
    %73 = vector.broadcast %cst_34 : f32 to vector<1x32xf32>
    %74 = arith.addf %72, %73 : vector<1x32xf32>
    %75 = math.rsqrt %74 : vector<1x32xf32>
    %76 = arith.mulf %61, %75 : vector<1x32xf32>
    %77 = arith.mulf %65, %76 : vector<1x32xf32>
    %78 = arith.subf %62, %77 : vector<1x32xf32>
    %79 = vector.broadcast %76 : vector<1x32xf32> to vector<32x32xf32>
    %80 = arith.mulf %57, %79 : vector<32x32xf32>
    %81 = vector.broadcast %78 : vector<1x32xf32> to vector<32x32xf32>
    %82 = arith.addf %80, %81 : vector<32x32xf32>
    %c0_35 = arith.constant 0 : index
    %c0_36 = arith.constant 0 : index
    %83 = vector.load %arg9[%c0_35, %c0_36] : memref<32x128xf32, #tpu.memory_space<vmem>>, vector<32x128xf32>
    %cst_37 = arith.constant dense<0.000000e+00> : vector<32x128xf32>
    %84 = tpu.matmul %82, %83, %cst_37 {dimension_numbers = #tpu.dot_dimension_numbers<[1], [0], [0], [1], [0, 0, 1, 1], [], []>} : vector<32x32xf32>, vector<32x128xf32>, vector<32x128xf32> -> vector<32x128xf32>
    %c0_38 = arith.constant 0 : index
    %c0_39 = arith.constant 0 : index
    %85 = vector.load %arg10[%c0_38, %c0_39] : memref<1x128xf32, #tpu.memory_space<vmem>>, vector<1x128xf32>
    %86 = vector.broadcast %85 : vector<1x128xf32> to vector<32x128xf32>
    %87 = arith.addf %84, %86 : vector<32x128xf32>
    %c0_40 = arith.constant 0 : index
    %c0_41 = arith.constant 0 : index
    %88 = vector.load %arg11[%c0_40, %c0_41] : memref<128x128xf32, #tpu.memory_space<vmem>>, vector<128x128xf32>
    %89 = tpu.iota {dimensions = array<i32: 1>} : vector<1x128xi32>
    %c12_i32 = arith.constant 12 : i32
    %90 = vector.broadcast %c12_i32 : i32 to vector<1x128xi32>
    %91 = arith.cmpi slt, %89, %90 : vector<1x128xi32>
    %cst_42 = arith.constant -1.000000e+30 : f32
    %92 = vector.shape_cast %91 : vector<1x128xi1> to vector<1x128xi1>
    %93 = vector.broadcast %92 : vector<1x128xi1> to vector<32x128xi1>
    %94 = vector.broadcast %cst_42 : f32 to vector<32x128xf32>
    %95 = arith.select %93, %87, %94 : vector<32x128xi1>, vector<32x128xf32>
    %cst_43 = arith.constant dense<0xFF800000> : vector<32xf32>
    %96 = vector.multi_reduction <maximumf>, %95, %cst_43 [1] : vector<32x128xf32> to vector<32xf32>
    %97 = vector.shape_cast %96 : vector<32xf32> to vector<32x1xf32>
    %98 = vector.broadcast %97 : vector<32x1xf32> to vector<32x128xf32>
    %99 = arith.subf %87, %98 : vector<32x128xf32>
    %cst_44 = arith.constant -1.000000e+30 : f32
    %100 = vector.shape_cast %91 : vector<1x128xi1> to vector<1x128xi1>
    %101 = vector.broadcast %100 : vector<1x128xi1> to vector<32x128xi1>
    %102 = vector.broadcast %cst_44 : f32 to vector<32x128xf32>
    %103 = arith.select %101, %99, %102 : vector<32x128xi1>, vector<32x128xf32>
    %104 = math.exp %103 : vector<32x128xf32>
    %cst_45 = arith.constant dense<0.000000e+00> : vector<32x128xf32>
    %105 = tpu.matmul %104, %88, %cst_45 {dimension_numbers = #tpu.dot_dimension_numbers<[1], [0], [0], [1], [0, 0, 1, 1], [], []>} : vector<32x128xf32>, vector<128x128xf32>, vector<32x128xf32> -> vector<32x128xf32>
    %cst_46 = arith.constant 1.000000e-30 : f32
    %106 = vector.broadcast %cst_46 : f32 to vector<32x128xf32>
    %107 = arith.maximumf %105, %106 : vector<32x128xf32>
    %cst_47 = arith.constant 1.000000e+00 : f32
    %108 = vector.shape_cast %91 : vector<1x128xi1> to vector<1x128xi1>
    %109 = vector.broadcast %108 : vector<1x128xi1> to vector<32x128xi1>
    %110 = vector.broadcast %cst_47 : f32 to vector<32x128xf32>
    %111 = arith.select %109, %107, %110 : vector<32x128xi1>, vector<32x128xf32>
    %112 = tpu.reciprocal %111 {approx = true} : vector<32x128xf32> -> vector<32x128xf32>
    %113 = arith.mulf %111, %112 : vector<32x128xf32>
    %cst_48 = arith.constant 2.000000e+00 : f32
    %114 = vector.broadcast %cst_48 : f32 to vector<32x128xf32>
    %115 = arith.subf %114, %113 : vector<32x128xf32>
    %116 = arith.mulf %112, %115 : vector<32x128xf32>
    %117 = arith.mulf %104, %116 : vector<32x128xf32>
    %118 = vector.shape_cast %91 : vector<1x128xi1> to vector<1x128xi1>
    %119 = vector.broadcast %118 : vector<1x128xi1> to vector<32x128xi1>
    %120 = arith.select %119, %117, %87 : vector<32x128xi1>, vector<32x128xf32>
    %c0_49 = arith.constant 0 : index
    %c0_50 = arith.constant 0 : index
    %121 = vector.load %arg12[%c0_49, %c0_50] : memref<32x128xf32, #tpu.memory_space<vmem>>, vector<32x128xf32>
    tpu.vector_store %arg12[%c0_49, %c0_50], %120 {strides = array<i32>} : memref<32x128xf32, #tpu.memory_space<vmem>>, vector<32x128xf32>,
    return
  }
}

</mosaic_0001>

<llo_original>
// kernel: tpu_custom_call.1
$region0: #{tpu_custom_call.1}
  #allocation0 [shape = 'u32[]', space=smem, size = 0x4, offset = 0x4, fixed_abs, tag = 'smem constant byte address 0x4 - core index']
  #allocation1 [shape = 'u32[144,128]{1,0:T(1,128)}', space=vmem, size = 0x12000, scoped, tag = 'internal scratch']
  %s0 = inlined_call_operand.vmem [shape: f32[32,128], index: 0, kind: input, shape index: {}]
  %s1 = inlined_call_operand.vmem [shape: f32[128,64], index: 1, kind: input, shape index: {}]
  %s2 = inlined_call_operand.vmem [shape: f32[1,64], index: 2, kind: input, shape index: {}]
  %s3 = inlined_call_operand.vmem [shape: f32[1,64], index: 3, kind: input, shape index: {}]
  %s4 = inlined_call_operand.vmem [shape: f32[1,64], index: 4, kind: input, shape index: {}]
  %s5 = inlined_call_operand.vmem [shape: f32[64,32], index: 5, kind: input, shape index: {}]
  %s6 = inlined_call_operand.vmem [shape: f32[1,32], index: 6, kind: input, shape index: {}]
  %s7 = inlined_call_operand.vmem [shape: f32[1,32], index: 7, kind: input, shape index: {}]
  %s8 = inlined_call_operand.vmem [shape: f32[1,32], index: 8, kind: input, shape index: {}]
  %s9 = inlined_call_operand.vmem [shape: f32[32,128], index: 9, kind: input, shape index: {}]
  %s10 = inlined_call_operand.vmem [shape: f32[1,128], index: 10, kind: input, shape index: {}]
  %s11 = inlined_call_operand.vmem [shape: f32[128,128], index: 11, kind: input, shape index: {}]
  %s12 = inlined_call_operand.hbm [shape: f32[32,128], index: 12, kind: output, shape index: {}]
  %s13 = sld [smem:[#allocation0]]
  $region58: #{tpu_custom_call.1} parent=0
    _
  %s15 = ssub.s32 1, %s13
  %s16 = scalar_select 0, %s15, %s13
  $region1: #{tpu_custom_call.1} parent=0
    #allocation2 [shape = 'u8[16384]{0}', space=vmem, size = 0x4000, scoped, tag = 'output window, operand 0, single buffered']
    #allocation3 [shape = 's32[1]{0}', space=sflag, size = 0x4, scoped, tag = 'scoped memory for tpu_custom_call.1']
    %17 = vsyncpa [#allocation3], 0
    // Predicated region
    $region2: #{tpu_custom_call.1} parent=1 // pred_check
      _
    $region3: #{tpu_custom_call.1} parent=1 // pred_check_branch
      %19 = sbr.rel (0) target = $region5
    $region4: #{tpu_custom_call.1} parent=1 // pred_region
      _
    $region5: #{tpu_custom_call.1} parent=1 // pred_fallthru
      _
    // Predicated region
    $region6: #{tpu_custom_call.1} parent=1 // pred_check
      _
    $region7: #{tpu_custom_call.1} parent=1 // pred_check_branch
      %21 = sbr.rel (0) target = $region9
    $region8: #{tpu_custom_call.1} parent=1 // pred_region
      _
    $region9: #{tpu_custom_call.1} parent=1 // pred_fallthru
      _
    // Predicated region
    $region10: #{tpu_custom_call.1} parent=1 // pred_check
      _
    $region11: #{tpu_custom_call.1} parent=1 // pred_check_branch
      %23 = sbr.rel (0) target = $region13
    $region12: #{tpu_custom_call.1} parent=1 // pred_region
      _
    $region13: #{tpu_custom_call.1} parent=1 // pred_fallthru
      _
    // Predicated region
    $region14: #{tpu_custom_call.1} parent=1 // pred_check
      _
    $region15: #{tpu_custom_call.1} parent=1 // pred_check_branch
      %25 = sbr.rel (0) target = $region17
    $region16: #{tpu_custom_call.1} parent=1 // pred_region
      _
    $region17: #{tpu_custom_call.1} parent=1 // pred_fallthru
      _
    // Predicated region
    $region18: #{tpu_custom_call.1} parent=1 // pred_check
      _
    $region19: #{tpu_custom_call.1} parent=1 // pred_check_branch
      %27 = sbr.rel (0) target = $region21
    $region20: #{tpu_custom_call.1} parent=1 // pred_region
      _
    $region21: #{tpu_custom_call.1} parent=1 // pred_fallthru
      _
    // Predicated region
    $region22: #{tpu_custom_call.1} parent=1 // pred_check
      _
    $region23: #{tpu_custom_call.1} parent=1 // pred_check_branch
      %29 = sbr.rel (0) target = $region25
    $region24: #{tpu_custom_call.1} parent=1 // pred_region
      _
    $region25: #{tpu_custom_call.1} parent=1 // pred_fallthru
      _
    // Predicated region
    $region26: #{tpu_custom_call.1} parent=1 // pred_check
      _
    $region27: #{tpu_custom_call.1} parent=1 // pred_check_branch
      %31 = sbr.rel (0) target = $region29
    $region28: #{tpu_custom_call.1} parent=1 // pred_region
      _
    $region29: #{tpu_custom_call.1} parent=1 // pred_fallthru
      _
    // Predicated region
    $region30: #{tpu_custom_call.1} parent=1 // pred_check
      _
    $region31: #{tpu_custom_call.1} parent=1 // pred_check_branch
      %33 = sbr.rel (0) target = $region33
    $region32: #{tpu_custom_call.1} parent=1 // pred_region
      _
    $region33: #{tpu_custom_call.1} parent=1 // pred_fallthru
      _
    // Predicated region
    $region34: #{tpu_custom_call.1} parent=1 // pred_check
      _
    $region35: #{tpu_custom_call.1} parent=1 // pred_check_branch
      %35 = sbr.rel (0) target = $region37
    $region36: #{tpu_custom_call.1} parent=1 // pred_region
      _
    $region37: #{tpu_custom_call.1} parent=1 // pred_fallthru
      _
    // Predicated region
    $region38: #{tpu_custom_call.1} parent=1 // pred_check
      _
    $region39: #{tpu_custom_call.1} parent=1 // pred_check_branch
      %37 = sbr.rel (0) target = $region41
    $region40: #{tpu_custom_call.1} parent=1 // pred_region
      _
    $region41: #{tpu_custom_call.1} parent=1 // pred_fallthru
      _
    // Predicated region
    $region42: #{tpu_custom_call.1} parent=1 // pred_check
      _
    $region43: #{tpu_custom_call.1} parent=1 // pred_check_branch
      %39 = sbr.rel (0) target = $region45
    $region44: #{tpu_custom_call.1} parent=1 // pred_region
      _
    $region45: #{tpu_custom_call.1} parent=1 // pred_fallthru
      _
    // Predicated region
    $region46: #{tpu_custom_call.1} parent=1 // pred_check
      _
    $region47: #{tpu_custom_call.1} parent=1 // pred_check_branch
      %41 = sbr.rel (0) target = $region49
    $region48: #{tpu_custom_call.1} parent=1 // pred_region
      _
    $region49: #{tpu_custom_call.1} parent=1 // pred_fallthru
      _
    %v42 = vlaneseq
    %v43 = vand.u32 %v42, 127
    %v44 = vlaneseq
    %v45 = vshrl.u32 %v44, 7
    %vm46 = vcmp.lt.s32.totalorder %v43, 32
    %v47 = vsub.s32 %v43, 32
    %v48 = vsel %vm46, %v43, %v47
    %vm49 = vcmp.lt.s32.totalorder %v48, 32
    %vm50 = vcmp.ne.s32.totalorder %v45, 0
    %vm51 = vmxor %vm50, %vm46
    %vm52 = vmand %vm51, %vm49
    %v53 = vsel %vm52, 1.0, 0.0
    %v54 = vld [vmem:[%s0] sm:$0xff]
    %v55 = vld [vmem:[%s0 + $0x8] sm:$0xff]
    %v56 = vld [vmem:[%s0 + $0x10] sm:$0xff]
    %v57 = vld [vmem:[%s0 + $0x18] sm:$0xff]
    %v58 = vld [vmem:[%s1] sm:$0xff]
    %v59 = vld [vmem:[%s1 + $0x8] sm:$0xff]
    %v60 = vld [vmem:[%s1 + $0x10] sm:$0xff]
    %v61 = vld [vmem:[%s1 + $0x18] sm:$0xff]
    %v62 = vld [vmem:[%s1 + $0x20] sm:$0xff]
    %v63 = vld [vmem:[%s1 + $0x28] sm:$0xff]
    %v64 = vld [vmem:[%s1 + $0x30] sm:$0xff]
    %v65 = vld [vmem:[%s1 + $0x38] sm:$0xff]
    %v66 = vld [vmem:[%s1 + $0x40] sm:$0xff]
    %v67 = vld [vmem:[%s1 + $0x48] sm:$0xff]
    %v68 = vld [vmem:[%s1 + $0x50] sm:$0xff]
    %v69 = vld [vmem:[%s1 + $0x58] sm:$0xff]
    %v70 = vld [vmem:[%s1 + $0x60] sm:$0xff]
    %v71 = vld [vmem:[%s1 + $0x68] sm:$0xff]
    %v72 = vld [vmem:[%s1 + $0x70] sm:$0xff]
    %v73 = vld [vmem:[%s1 + $0x78] sm:$0xff]
    %v74 = vld [vmem:[%s2] sm:$0x1]
    %v76 = vlaneseq
    %v77 = vshrl.u32 %v76, 7
    %v78 = vsub.s32 0, %v77
    %v79 = vrot.slane %v74, %v78
    %81 = vmatprep.subr.mxu0 0.0
    %82 = vmatpush1.msra.mxu0 %v58
    %83 = vmatprep.subr.mxu0 0.0
    %84 = vmatpush1.msra.mxu0 %v59
    %85 = vmatprep.subr.mxu0 0.0
    %86 = vmatpush1.msra.mxu0 %v60
    %87 = vmatprep.subr.mxu0 0.0
    %88 = vmatpush1.msra.mxu0 %v61
    %89 = vmatprep.subr.mxu0 0.0
    %90 = vmatpush1.msra.mxu0 %v62
    %91 = vmatprep.subr.mxu0 0.0
    %92 = vmatpush1.msra.mxu0 %v63
    %93 = vmatprep.subr.mxu0 0.0
    %94 = vmatpush1.msra.mxu0 %v64
    %95 = vmatprep.subr.mxu0 0.0
    %96 = vmatpush1.msra.mxu0 %v65
    %97 = vmatprep.subr.mxu0 0.0
    %98 = vmatpush1.msra.mxu0 %v66
    %99 = vmatprep.subr.mxu0 0.0
    %100 = vmatpush1.msra.mxu0 %v67
    %101 = vmatprep.subr.mxu0 0.0
    %102 = vmatpush1.msra.mxu0 %v68
    %103 = vmatprep.subr.mxu0 0.0
    %104 = vmatpush1.msra.mxu0 %v69
    %105 = vmatprep.subr.mxu0 0.0
    %106 = vmatpush1.msra.mxu0 %v70
    %107 = vmatprep.subr.mxu0 0.0
    %108 = vmatpush1.msra.mxu0 %v71
    %109 = vmatprep.subr.mxu0 0.0
    %110 = vmatpush1.msra.mxu0 %v72
    %111 = vmatprep.subr.mxu0 0.0
    %112 = vmatpush1.msra.mxu0 %v73
    %113 = vmatprep.subr.mxu0 0.0
    %114 = vmatpush1.msra.mxu0 0.0
    %115 = vmatprep.subr.mxu0 0.0
    %116 = vmatpush1.msra.mxu0 0.0
    %117 = vmatprep.subr.mxu0 0.0
    %118 = vmatpush1.msra.mxu0 0.0
    %119 = vmatprep.subr.mxu0 0.0
    %120 = vmatpush1.msra.mxu0 0.0
    %121 = vmatprep.subr.mxu0 0.0
    %122 = vmatpush1.msra.mxu0 0.0
    %123 = vmatprep.subr.mxu0 0.0
    %124 = vmatpush1.msra.mxu0 0.0
    %125 = vmatprep.subr.mxu0 0.0
    %126 = vmatpush1.msra.mxu0 0.0
    %127 = vmatprep.subr.mxu0 0.0
    %128 = vmatpush1.msra.mxu0 0.0
    %129 = vmatprep.subr.mxu0 0.0
    %130 = vmatpush1.msra.mxu0 0.0
    %131 = vmatprep.subr.mxu0 0.0
    %132 = vmatpush1.msra.mxu0 0.0
    %133 = vmatprep.subr.mxu0 0.0
    %134 = vmatpush1.msra.mxu0 0.0
    %135 = vmatprep.subr.mxu0 0.0
    %136 = vmatpush1.msra.mxu0 0.0
    %137 = vmatprep.subr.mxu0 0.0
    %138 = vmatpush1.msra.mxu0 0.0
    %139 = vmatprep.subr.mxu0 0.0
    %140 = vmatpush1.msra.mxu0 0.0
    %141 = vmatprep.subr.mxu0 0.0
    %142 = vmatpush1.msra.mxu0 0.0
    %143 = vmatprep.subr.mxu0 0.0
    %144 = vmatpush1.msra.mxu0 0.0
    %145 = vmatprep.mubr.f32.mxu0 0.0
    %146 = vmatmul.mubr.f32.gmra.mrb[0].mxu0 %v54
    %v147 = vpop.f32.mrb[0].mxu0
    %v148 = vadd.f32 %v79, %v147
    %v149 = vpop.f32.mrb[0].mxu0
    %150 = vmatprep.mubr.f32.mxu0 0.0
    %151 = vmatmul.mubr.f32.gmra.mrb[0].mxu0 %v55
    %v152 = vpop.f32.mrb[0].mxu0
    %v153 = vadd.f32 %v79, %v152
    %v154 = vpop.f32.mrb[0].mxu0
    %155 = vmatprep.mubr.f32.mxu0 0.0
    %156 = vmatmul.mubr.f32.gmra.mrb[0].mxu0 %v56
    %v157 = vpop.f32.mrb[0].mxu0
    %v158 = vadd.f32 %v79, %v157
    %v159 = vpop.f32.mrb[0].mxu0
    %160 = vmatprep.mubr.f32.mxu0 0.0
    %161 = vmatmul.mubr.f32.gmra.mrb[0].mxu0 %v57
    %v162 = vpop.f32.mrb[0].mxu0
    %v163 = vadd.f32 %v79, %v162
    %v164 = vpop.f32.mrb[0].mxu0
    %165 = vdwg.mxu0
    %v166 = vmax.f32 %v148, 0.0
    %v167 = vmax.f32 %v153, 0.0
    %v168 = vmax.f32 %v158, 0.0
    %v169 = vmax.f32 %v163, 0.0
    %v170 = vmul.f32 %v166, %v166
    %v171 = vmul.f32 %v167, %v167
    %v172 = vmul.f32 %v168, %v168
    %v173 = vmul.f32 %v169, %v169
    %vm174 = vcmask 523264
    %v176 = vsel %vm174, %v53, 0
    %178 = vmatprep.subr.mxu0 0.0
    %179 = vmatpush1.msra.mxu0 %v166
    %180 = vmatprep.subr.mxu0 0.0
    %181 = vmatpush1.msra.mxu0 %v167
    %182 = vmatprep.subr.mxu0 0.0
    %183 = vmatpush1.msra.mxu0 %v168
    %184 = vmatprep.subr.mxu0 0.0
    %185 = vmatpush1.msra.mxu0 %v169
    %186 = vmatprep.subr.mxu0 0.0
    %187 = vmatpush1.msra.mxu0 %v170
    %188 = vmatprep.subr.mxu0 0.0
    %189 = vmatpush1.msra.mxu0 %v171
    %190 = vmatprep.subr.mxu0 0.0
    %191 = vmatpush1.msra.mxu0 %v172
    %192 = vmatprep.subr.mxu0 0.0
    %193 = vmatpush1.msra.mxu0 %v173
    %194 = vmatprep.subr.mxu0 0.0
    %195 = vmatpush1.msra.mxu0 0.0
    %196 = vmatprep.subr.mxu0 0.0
    %197 = vmatpush1.msra.mxu0 0.0
    %198 = vmatprep.subr.mxu0 0.0
    %199 = vmatpush1.msra.mxu0 0.0
    %200 = vmatprep.subr.mxu0 0.0
    %201 = vmatpush1.msra.mxu0 0.0
    %202 = vmatprep.subr.mxu0 0.0
    %203 = vmatpush1.msra.mxu0 0.0
    %204 = vmatprep.subr.mxu0 0.0
    %205 = vmatpush1.msra.mxu0 0.0
    %206 = vmatprep.subr.mxu0 0.0
    %207 = vmatpush1.msra.mxu0 0.0
    %208 = vmatprep.subr.mxu0 0.0
    %209 = vmatpush1.msra.mxu0 0.0
    %210 = vmatprep.subr.mxu0 0.0
    %211 = vmatpush1.msra.mxu0 0.0
    %212 = vmatprep.subr.mxu0 0.0
    %213 = vmatpush1.msra.mxu0 0.0
    %214 = vmatprep.subr.mxu0 0.0
    %215 = vmatpush1.msra.mxu0 0.0
    %216 = vmatprep.subr.mxu0 0.0
    %217 = vmatpush1.msra.mxu0 0.0
    %218 = vmatprep.subr.mxu0 0.0
    %219 = vmatpush1.msra.mxu0 0.0
    %220 = vmatprep.subr.mxu0 0.0
    %221 = vmatpush1.msra.mxu0 0.0
    %222 = vmatprep.subr.mxu0 0.0
    %223 = vmatpush1.msra.mxu0 0.0
    %224 = vmatprep.subr.mxu0 0.0
    %225 = vmatpush1.msra.mxu0 0.0
    %226 = vmatprep.subr.mxu0 0.0
    %227 = vmatpush1.msra.mxu0 0.0
    %228 = vmatprep.subr.mxu0 0.0
    %229 = vmatpush1.msra.mxu0 0.0
    %230 = vmatprep.subr.mxu0 0.0
    %231 = vmatpush1.msra.mxu0 0.0
    %232 = vmatprep.subr.mxu0 0.0
    %233 = vmatpush1.msra.mxu0 0.0
    %234 = vmatprep.subr.mxu0 0.0
    %235 = vmatpush1.msra.mxu0 0.0
    %236 = vmatprep.subr.mxu0 0.0
    %237 = vmatpush1.msra.mxu0 0.0
    %238 = vmatprep.subr.mxu0 0.0
    %239 = vmatpush1.msra.mxu0 0.0
    %240 = vmatprep.subr.mxu0 0.0
    %241 = vmatpush1.msra.mxu0 0.0
    %242 = vmatprep.mubr.f32.mxu0 0.0
    %243 = vmatmul.mubr.f32.gmra.mrb[0].mxu0 %v176
    %v244 = vpop.f32.mrb[0].mxu0
    %v245 = vadd.f32 0.0, %v244
    %v246 = vpop.f32.mrb[0].mxu0
    %247 = vdwg.mxu0
    %v248 = vld [vmem:[%s3] sm:$0x1]
    %v249 = vld [vmem:[%s4] sm:$0x1]
    %v250 = vmul.f32 %v245, 0.03125
    %v251 = vmul.f32 %v250, %v250
    %v253 = vrot.slane %v251, 7
    %v255 = vsub.f32 %v250, %v253
    %v256 = vmax.f32 %v255, 0.0
    %v257 = vadd.f32 %v256, 1e-05
    %v258 = vrsqrt.pop %v257
    %v261 = vunpack.c.l.s4 1966171168
    %v262 = vunpack.c.0.s8 %v261
    %v263 = vlaneseq
    %v264 = vshrl.u32 %v263, 7
    %v265 = vsub.s32 %v262, %v264
    %v266 = vrot.slane %v258, %v265
    %v267 = vcombine.high %v266, %v266
    %v269 = vunpack.c.l.s4 1966171168
    %v270 = vunpack.c.0.s8 %v269
    %v271 = vlaneseq
    %v272 = vshrl.u32 %v271, 7
    %v273 = vsub.s32 %v270, %v272
    %v274 = vrot.slane %v267, %v273
    %v276 = vmul.f32 %v248, %v274
    %v277 = vmul.f32 %v250, %v276
    %v278 = vsub.f32 %v249, %v277
    %v280 = vlaneseq
    %v281 = vshrl.u32 %v280, 7
    %v282 = vsub.s32 0, %v281
    %v283 = vrot.slane %v276, %v282
    %v285 = vmul.f32 %v166, %v283
    %v286 = vmul.f32 %v167, %v283
    %v287 = vmul.f32 %v168, %v283
    %v288 = vmul.f32 %v169, %v283
    %v290 = vlaneseq
    %v291 = vshrl.u32 %v290, 7
    %v292 = vsub.s32 0, %v291
    %v293 = vrot.slane %v278, %v292
    %v295 = vadd.f32 %v285, %v293
    %v296 = vadd.f32 %v286, %v293
    %v297 = vadd.f32 %v287, %v293
    %v298 = vadd.f32 %v288, %v293
    %v299 = vld [vmem:[%s5] sm:$0xff]
    %v300 = vld [vmem:[%s5 + $0x8] sm:$0xff]
    %v301 = vld [vmem:[%s5 + $0x10] sm:$0xff]
    %v302 = vld [vmem:[%s5 + $0x18] sm:$0xff]
    %v303 = vld [vmem:[%s5 + $0x20] sm:$0xff]
    %v304 = vld [vmem:[%s5 + $0x28] sm:$0xff]
    %v305 = vld [vmem:[%s5 + $0x30] sm:$0xff]
    %v306 = vld [vmem:[%s5 + $0x38] sm:$0xff]
    %v307 = vld [vmem:[%s6] sm:$0x1]
    %v309 = vlaneseq
    %v310 = vshrl.u32 %v309, 7
    %v311 = vsub.s32 0, %v310
    %v312 = vrot.slane %v307, %v311
    %v315 = vsel %vm174, %v295, 0
    %v318 = vsel %vm174, %v296, 0
    %v321 = vsel %vm174, %v297, 0
    %v324 = vsel %vm174, %v298, 0
    %326 = vmatprep.subr.mxu0 0.0
    %327 = vmatpush1.msra.mxu0 %v299
    %328 = vmatprep.subr.mxu0 0.0
    %329 = vmatpush1.msra.mxu0 %v300
    %330 = vmatprep.subr.mxu0 0.0
    %331 = vmatpush1.msra.mxu0 %v301
    %332 = vmatprep.subr.mxu0 0.0
    %333 = vmatpush1.msra.mxu0 %v302
    %334 = vmatprep.subr.mxu0 0.0
    %335 = vmatpush1.msra.mxu0 %v303
    %336 = vmatprep.subr.mxu0 0.0
    %337 = vmatpush1.msra.mxu0 %v304
    %338 = vmatprep.subr.mxu0 0.0
    %339 = vmatpush1.msra.mxu0 %v305
    %340 = vmatprep.subr.mxu0 0.0
    %341 = vmatpush1.msra.mxu0 %v306
    %342 = vmatprep.subr.mxu0 0.0
    %343 = vmatpush1.msra.mxu0 0.0
    %344 = vmatprep.subr.mxu0 0.0
    %345 = vmatpush1.msra.mxu0 0.0
    %346 = vmatprep.subr.mxu0 0.0
    %347 = vmatpush1.msra.mxu0 0.0
    %348 = vmatprep.subr.mxu0 0.0
    %349 = vmatpush1.msra.mxu0 0.0
    %350 = vmatprep.subr.mxu0 0.0
    %351 = vmatpush1.msra.mxu0 0.0
    %352 = vmatprep.subr.mxu0 0.0
    %353 = vmatpush1.msra.mxu0 0.0
    %354 = vmatprep.subr.mxu0 0.0
    %355 = vmatpush1.msra.mxu0 0.0
    %356 = vmatprep.subr.mxu0 0.0
    %357 = vmatpush1.msra.mxu0 0.0
    %358 = vmatprep.subr.mxu0 0.0
    %359 = vmatpush1.msra.mxu0 0.0
    %360 = vmatprep.subr.mxu0 0.0
    %361 = vmatpush1.msra.mxu0 0.0
    %362 = vmatprep.subr.mxu0 0.0
    %363 = vmatpush1.msra.mxu0 0.0
    %364 = vmatprep.subr.mxu0 0.0
    %365 = vmatpush1.msra.mxu0 0.0
    %366 = vmatprep.subr.mxu0 0.0
    %367 = vmatpush1.msra.mxu0 0.0
    %368 = vmatprep.subr.mxu0 0.0
    %369 = vmatpush1.msra.mxu0 0.0
    %370 = vmatprep.subr.mxu0 0.0
    %371 = vmatpush1.msra.mxu0 0.0
    %372 = vmatprep.subr.mxu0 0.0
    %373 = vmatpush1.msra.mxu0 0.0
    %374 = vmatprep.subr.mxu0 0.0
    %375 = vmatpush1.msra.mxu0 0.0
    %376 = vmatprep.subr.mxu0 0.0
    %377 = vmatpush1.msra.mxu0 0.0
    %378 = vmatprep.subr.mxu0 0.0
    %379 = vmatpush1.msra.mxu0 0.0
    %380 = vmatprep.subr.mxu0 0.0
    %381 = vmatpush1.msra.mxu0 0.0
    %382 = vmatprep.subr.mxu0 0.0
    %383 = vmatpush1.msra.mxu0 0.0
    %384 = vmatprep.subr.mxu0 0.0
    %385 = vmatpush1.msra.mxu0 0.0
    %386 = vmatprep.subr.mxu0 0.0
    %387 = vmatpush1.msra.mxu0 0.0
    %388 = vmatprep.subr.mxu0 0.0
    %389 = vmatpush1.msra.mxu0 0.0
    %390 = vmatprep.mubr.f32.mxu0 0.0
    %391 = vmatmul.mubr.f32.gmra.mrb[0].mxu0 %v315
    %v392 = vpop.f32.mrb[0].mxu0
    %v393 = vadd.f32 %v312, %v392
    %v394 = vpop.f32.mrb[0].mxu0
    %395 = vmatprep.mubr.f32.mxu0 0.0
    %396 = vmatmul.mubr.f32.gmra.mrb[0].mxu0 %v318
    %v397 = vpop.f32.mrb[0].mxu0
    %v398 = vadd.f32 %v312, %v397
    %v399 = vpop.f32.mrb[0].mxu0
    %400 = vmatprep.mubr.f32.mxu0 0.0
    %401 = vmatmul.mubr.f32.gmra.mrb[0].mxu0 %v321
    %v402 = vpop.f32.mrb[0].mxu0
    %v403 = vadd.f32 %v312, %v402
    %v404 = vpop.f32.mrb[0].mxu0
    %405 = vmatprep.mubr.f32.mxu0 0.0
    %406 = vmatmul.mubr.f32.gmra.mrb[0].mxu0 %v324
    %v407 = vpop.f32.mrb[0].mxu0
    %v408 = vadd.f32 %v312, %v407
    %v409 = vpop.f32.mrb[0].mxu0
    %410 = vdwg.mxu0
    %v411 = vmax.f32 %v393, 0.0
    %v412 = vmax.f32 %v398, 0.0
    %v413 = vmax.f32 %v403, 0.0
    %v414 = vmax.f32 %v408, 0.0
    %v415 = vmul.f32 %v411, %v411
    %v416 = vmul.f32 %v412, %v412
    %v417 = vmul.f32 %v413, %v413
    %v418 = vmul.f32 %v414, %v414
    %419 = vmatprep.subr.mxu0 0.0
    %420 = vmatpush1.msra.mxu0 %v411
    %421 = vmatprep.subr.mxu0 0.0
    %422 = vmatpush1.msra.mxu0 %v412
    %423 = vmatprep.subr.mxu0 0.0
    %424 = vmatpush1.msra.mxu0 %v413
    %425 = vmatprep.subr.mxu0 0.0
    %426 = vmatpush1.msra.mxu0 %v414
    %427 = vmatprep.subr.mxu0 0.0
    %428 = vmatpush1.msra.mxu0 %v415
    %429 = vmatprep.subr.mxu0 0.0
    %430 = vmatpush1.msra.mxu0 %v416
    %431 = vmatprep.subr.mxu0 0.0
    %432 = vmatpush1.msra.mxu0 %v417
    %433 = vmatprep.subr.mxu0 0.0
    %434 = vmatpush1.msra.mxu0 %v418
    %435 = vmatprep.subr.mxu0 0.0
    %436 = vmatpush1.msra.mxu0 0.0
    %437 = vmatprep.subr.mxu0 0.0
    %438 = vmatpush1.msra.mxu0 0.0
    %439 = vmatprep.subr.mxu0 0.0
    %440 = vmatpush1.msra.mxu0 0.0
    %441 = vmatprep.subr.mxu0 0.0
    %442 = vmatpush1.msra.mxu0 0.0
    %443 = vmatprep.subr.mxu0 0.0
    %444 = vmatpush1.msra.mxu0 0.0
    %445 = vmatprep.subr.mxu0 0.0
    %446 = vmatpush1.msra.mxu0 0.0
    %447 = vmatprep.subr.mxu0 0.0
    %448 = vmatpush1.msra.mxu0 0.0
    %449 = vmatprep.subr.mxu0 0.0
    %450 = vmatpush1.msra.mxu0 0.0
    %451 = vmatprep.subr.mxu0 0.0
    %452 = vmatpush1.msra.mxu0 0.0
    %453 = vmatprep.subr.mxu0 0.0
    %454 = vmatpush1.msra.mxu0 0.0
    %455 = vmatprep.subr.mxu0 0.0
    %456 = vmatpush1.msra.mxu0 0.0
    %457 = vmatprep.subr.mxu0 0.0
    %458 = vmatpush1.msra.mxu0 0.0
    %459 = vmatprep.subr.mxu0 0.0
    %460 = vmatpush1.msra.mxu0 0.0
    %461 = vmatprep.subr.mxu0 0.0
    %462 = vmatpush1.msra.mxu0 0.0
    %463 = vmatprep.subr.mxu0 0.0
    %464 = vmatpush1.msra.mxu0 0.0
    %465 = vmatprep.subr.mxu0 0.0
    %466 = vmatpush1.msra.mxu0 0.0
    %467 = vmatprep.subr.mxu0 0.0
    %468 = vmatpush1.msra.mxu0 0.0
    %469 = vmatprep.subr.mxu0 0.0
    %470 = vmatpush1.msra.mxu0 0.0
    %471 = vmatprep.subr.mxu0 0.0
    %472 = vmatpush1.msra.mxu0 0.0
    %473 = vmatprep.subr.mxu0 0.0
    %474 = vmatpush1.msra.mxu0 0.0
    %475 = vmatprep.subr.mxu0 0.0
    %476 = vmatpush1.msra.mxu0 0.0
    %477 = vmatprep.subr.mxu0 0.0
    %478 = vmatpush1.msra.mxu0 0.0
    %479 = vmatprep.subr.mxu0 0.0
    %480 = vmatpush1.msra.mxu0 0.0
    %481 = vmatprep.subr.mxu0 0.0
    %482 = vmatpush1.msra.mxu0 0.0
    %483 = vmatprep.mubr.f32.mxu0 0.0
    %484 = vmatmul.mubr.f32.gmra.mrb[0].mxu0 %v176
    %v485 = vpop.f32.mrb[0].mxu0
    %v486 = vadd.f32 0.0, %v485
    %v487 = vpop.f32.mrb[0].mxu0
    %488 = vdwg.mxu0
    %v489 = vld [vmem:[%s7] sm:$0x1]
    %v490 = vld [vmem:[%s8] sm:$0x1]
    %v491 = vmul.f32 %v486, 0.03125
    %v492 = vmul.f32 %v491, %v491
    %v494 = vrot.slane %v492, 7
    %v496 = vsub.f32 %v491, %v494
    %v497 = vmax.f32 %v496, 0.0
    %v498 = vadd.f32 %v497, 1e-05
    %v499 = vrsqrt.pop %v498
    %v502 = vunpack.c.l.s4 1966171168
    %v503 = vunpack.c.0.s8 %v502
    %v504 = vlaneseq
    %v505 = vshrl.u32 %v504, 7
    %v506 = vsub.s32 %v503, %v505
    %v507 = vrot.slane %v499, %v506
    %v508 = vcombine.high %v507, %v507
    %v510 = vunpack.c.l.s4 1966171168
    %v511 = vunpack.c.0.s8 %v510
    %v512 = vlaneseq
    %v513 = vshrl.u32 %v512, 7
    %v514 = vsub.s32 %v511, %v513
    %v515 = vrot.slane %v508, %v514
    %v517 = vmul.f32 %v489, %v515
    %v518 = vmul.f32 %v491, %v517
    %v519 = vsub.f32 %v490, %v518
    %v521 = vlaneseq
    %v522 = vshrl.u32 %v521, 7
    %v523 = vsub.s32 0, %v522
    %v524 = vrot.slane %v517, %v523
    %v526 = vmul.f32 %v411, %v524
    %v527 = vmul.f32 %v412, %v524
    %v528 = vmul.f32 %v413, %v524
    %v529 = vmul.f32 %v414, %v524
    %v531 = vlaneseq
    %v532 = vshrl.u32 %v531, 7
    %v533 = vsub.s32 0, %v532
    %v534 = vrot.slane %v519, %v533
    %v536 = vadd.f32 %v526, %v534
    %v537 = vadd.f32 %v527, %v534
    %v538 = vadd.f32 %v528, %v534
    %v539 = vadd.f32 %v529, %v534
    %v540 = vld [vmem:[%s9] sm:$0xff]
    %v541 = vld [vmem:[%s9 + $0x8] sm:$0xff]
    %v542 = vld [vmem:[%s9 + $0x10] sm:$0xff]
    %v543 = vld [vmem:[%s9 + $0x18] sm:$0xff]
    %v544 = vld [vmem:[%s10] sm:$0x1]
    %v546 = vlaneseq
    %v547 = vshrl.u32 %v546, 7
    %v548 = vsub.s32 0, %v547
    %v549 = vrot.slane %v544, %v548
    %vm551 = vcmask 261120
    %v553 = vsel %vm551, %v536, 0
    %v556 = vsel %vm551, %v537, 0
    %v559 = vsel %vm551, %v538, 0
    %v562 = vsel %vm551, %v539, 0
    %564 = vmatprep.subr.mxu0 0.0
    %565 = vmatpush1.msra.mxu0 %v540
    %566 = vmatprep.subr.mxu0 0.0
    %567 = vmatpush1.msra.mxu0 %v541
    %568 = vmatprep.subr.mxu0 0.0
    %569 = vmatpush1.msra.mxu0 %v542
    %570 = vmatprep.subr.mxu0 0.0
    %571 = vmatpush1.msra.mxu0 %v543
    %572 = vmatprep.subr.mxu0 0.0
    %573 = vmatpush1.msra.mxu0 0.0
    %574 = vmatprep.subr.mxu0 0.0
    %575 = vmatpush1.msra.mxu0 0.0
    %576 = vmatprep.subr.mxu0 0.0
    %577 = vmatpush1.msra.mxu0 0.0
    %578 = vmatprep.subr.mxu0 0.0
    %579 = vmatpush1.msra.mxu0 0.0
    %580 = vmatprep.subr.mxu0 0.0
    %581 = vmatpush1.msra.mxu0 0.0
    %582 = vmatprep.subr.mxu0 0.0
    %583 = vmatpush1.msra.mxu0 0.0
    %584 = vmatprep.subr.mxu0 0.0
    %585 = vmatpush1.msra.mxu0 0.0
    %586 = vmatprep.subr.mxu0 0.0
    %587 = vmatpush1.msra.mxu0 0.0
    %588 = vmatprep.subr.mxu0 0.0
    %589 = vmatpush1.msra.mxu0 0.0
    %590 = vmatprep.subr.mxu0 0.0
    %591 = vmatpush1.msra.mxu0 0.0
    %592 = vmatprep.subr.mxu0 0.0
    %593 = vmatpush1.msra.mxu0 0.0
    %594 = vmatprep.subr.mxu0 0.0
    %595 = vmatpush1.msra.mxu0 0.0
    %596 = vmatprep.subr.mxu0 0.0
    %597 = vmatpush1.msra.mxu0 0.0
    %598 = vmatprep.subr.mxu0 0.0
    %599 = vmatpush1.msra.mxu0 0.0
    %600 = vmatprep.subr.mxu0 0.0
    %601 = vmatpush1.msra.mxu0 0.0
    %602 = vmatprep.subr.mxu0 0.0
    %603 = vmatpush1.msra.mxu0 0.0
    %604 = vmatprep.subr.mxu0 0.0
    %605 = vmatpush1.msra.mxu0 0.0
    %606 = vmatprep.subr.mxu0 0.0
    %607 = vmatpush1.msra.mxu0 0.0
    %608 = vmatprep.subr.mxu0 0.0
    %609 = vmatpush1.msra.mxu0 0.0
    %610 = vmatprep.subr.mxu0 0.0
    %611 = vmatpush1.msra.mxu0 0.0
    %612 = vmatprep.subr.mxu0 0.0
    %613 = vmatpush1.msra.mxu0 0.0
    %614 = vmatprep.subr.mxu0 0.0
    %615 = vmatpush1.msra.mxu0 0.0
    %616 = vmatprep.subr.mxu0 0.0
    %617 = vmatpush1.msra.mxu0 0.0
    %618 = vmatprep.subr.mxu0 0.0
    %619 = vmatpush1.msra.mxu0 0.0
    %620 = vmatprep.subr.mxu0 0.0
    %621 = vmatpush1.msra.mxu0 0.0
    %622 = vmatprep.subr.mxu0 0.0
    %623 = vmatpush1.msra.mxu0 0.0
    %624 = vmatprep.subr.mxu0 0.0
    %625 = vmatpush1.msra.mxu0 0.0
    %626 = vmatprep.subr.mxu0 0.0
    %627 = vmatpush1.msra.mxu0 0.0
    %628 = vmatprep.mubr.f32.mxu0 0.0
    %629 = vmatmul.mubr.f32.gmra.mrb[0].mxu0 %v553
    %v630 = vpop.f32.mrb[0].mxu0
    %v631 = vadd.f32 %v549, %v630
    %v632 = vpop.f32.mrb[0].mxu0
    %633 = vmatprep.mubr.f32.mxu0 0.0
    %634 = vmatmul.mubr.f32.gmra.mrb[0].mxu0 %v556
    %v635 = vpop.f32.mrb[0].mxu0
    %v636 = vadd.f32 %v549, %v635
    %v637 = vpop.f32.mrb[0].mxu0
    %638 = vmatprep.mubr.f32.mxu0 0.0
    %639 = vmatmul.mubr.f32.gmra.mrb[0].mxu0 %v559
    %v640 = vpop.f32.mrb[0].mxu0
    %v641 = vadd.f32 %v549, %v640
    %v642 = vpop.f32.mrb[0].mxu0
    %643 = vmatprep.mubr.f32.mxu0 0.0
    %644 = vmatmul.mubr.f32.gmra.mrb[0].mxu0 %v562
    %v645 = vpop.f32.mrb[0].mxu0
    %v646 = vadd.f32 %v549, %v645
    %v647 = vpop.f32.mrb[0].mxu0
    %648 = vdwg.mxu0
    %v649 = vld [vmem:[%s11] sm:$0xff]
    %v650 = vld [vmem:[%s11 + $0x8] sm:$0xff]
    %v651 = vld [vmem:[%s11 + $0x10] sm:$0xff]
    %v652 = vld [vmem:[%s11 + $0x18] sm:$0xff]
    %v653 = vld [vmem:[%s11 + $0x20] sm:$0xff]
    %v654 = vld [vmem:[%s11 + $0x28] sm:$0xff]
    %v655 = vld [vmem:[%s11 + $0x30] sm:$0xff]
    %v656 = vld [vmem:[%s11 + $0x38] sm:$0xff]
    %v657 = vld [vmem:[%s11 + $0x40] sm:$0xff]
    %v658 = vld [vmem:[%s11 + $0x48] sm:$0xff]
    %v659 = vld [vmem:[%s11 + $0x50] sm:$0xff]
    %v660 = vld [vmem:[%s11 + $0x58] sm:$0xff]
    %v661 = vld [vmem:[%s11 + $0x60] sm:$0xff]
    %v662 = vld [vmem:[%s11 + $0x68] sm:$0xff]
    %v663 = vld [vmem:[%s11 + $0x70] sm:$0xff]
    %v664 = vld [vmem:[%s11 + $0x78] sm:$0xff]
    %vm665 = vcmp.lt.s32.totalorder %v43, 12
    %v666 = vsel %vm665, 1, 0
    %vm667 = vcmp.eq.s32.totalorder %v666, 1
    %v668 = vsel %vm667, %v631, -1e+30
    %v669 = vsel %vm667, %v636, -1e+30
    %v670 = vsel %vm667, %v641, -1e+30
    %v671 = vsel %vm667, %v646, -1e+30
    %672 = vmax.xlane.f32.xlu0 %v668
    %v673 = vpop.xlane.xlu0 %672
    %674 = vmax.xlane.f32.xlu0 %v669
    %v675 = vpop.xlane.xlu0 %674
    %676 = vmax.xlane.f32.xlu0 %v670
    %v677 = vpop.xlane.xlu0 %676
    %678 = vmax.xlane.f32.xlu0 %v671
    %v679 = vpop.xlane.xlu0 %678
    %v680 = vsub.f32 %v631, %v673
    %v681 = vsub.f32 %v636, %v675
    %v682 = vsub.f32 %v641, %v677
    %v683 = vsub.f32 %v646, %v679
    %v684 = vsel %vm667, %v680, -1e+30
    %v685 = vsel %vm667, %v681, -1e+30
    %v686 = vsel %vm667, %v682, -1e+30
    %v687 = vsel %vm667, %v683, -1e+30
    %v688 = vmul.f32 %v684, 1.442695
    %v689 = vpow.pop %v688
    %v690 = vmul.f32 %v685, 1.442695
    %v691 = vpow.pop %v690
    %v692 = vmul.f32 %v686, 1.442695
    %v693 = vpow.pop %v692
    %v694 = vmul.f32 %v687, 1.442695
    %v695 = vpow.pop %v694
    %696 = vmatprep.subr.mxu0 0.0
    %697 = vmatpush1.msra.mxu0 %v649
    %698 = vmatprep.subr.mxu0 0.0
    %699 = vmatpush1.msra.mxu0 %v650
    %700 = vmatprep.subr.mxu0 0.0
    %701 = vmatpush1.msra.mxu0 %v651
    %702 = vmatprep.subr.mxu0 0.0
    %703 = vmatpush1.msra.mxu0 %v652
    %704 = vmatprep.subr.mxu0 0.0
    %705 = vmatpush1.msra.mxu0 %v653
    %706 = vmatprep.subr.mxu0 0.0
    %707 = vmatpush1.msra.mxu0 %v654
    %708 = vmatprep.subr.mxu0 0.0
    %709 = vmatpush1.msra.mxu0 %v655
    %710 = vmatprep.subr.mxu0 0.0
    %711 = vmatpush1.msra.mxu0 %v656
    %712 = vmatprep.subr.mxu0 0.0
    %713 = vmatpush1.msra.mxu0 %v657
    %714 = vmatprep.subr.mxu0 0.0
    %715 = vmatpush1.msra.mxu0 %v658
    %716 = vmatprep.subr.mxu0 0.0
    %717 = vmatpush1.msra.mxu0 %v659
    %718 = vmatprep.subr.mxu0 0.0
    %719 = vmatpush1.msra.mxu0 %v660
    %720 = vmatprep.subr.mxu0 0.0
    %721 = vmatpush1.msra.mxu0 %v661
    %722 = vmatprep.subr.mxu0 0.0
    %723 = vmatpush1.msra.mxu0 %v662
    %724 = vmatprep.subr.mxu0 0.0
    %725 = vmatpush1.msra.mxu0 %v663
    %726 = vmatprep.subr.mxu0 0.0
    %727 = vmatpush1.msra.mxu0 %v664
    %728 = vmatprep.subr.mxu0 0.0
    %729 = vmatpush1.msra.mxu0 0.0
    %730 = vmatprep.subr.mxu0 0.0
    %731 = vmatpush1.msra.mxu0 0.0
    %732 = vmatprep.subr.mxu0 0.0
    %733 = vmatpush1.msra.mxu0 0.0
    %734 = vmatprep.subr.mxu0 0.0
    %735 = vmatpush1.msra.mxu0 0.0
    %736 = vmatprep.subr.mxu0 0.0
    %737 = vmatpush1.msra.mxu0 0.0
    %738 = vmatprep.subr.mxu0 0.0
    %739 = vmatpush1.msra.mxu0 0.0
    %740 = vmatprep.subr.mxu0 0.0
    %741 = vmatpush1.msra.mxu0 0.0
    %742 = vmatprep.subr.mxu0 0.0
    %743 = vmatpush1.msra.mxu0 0.0
    %744 = vmatprep.subr.mxu0 0.0
    %745 = vmatpush1.msra.mxu0 0.0
    %746 = vmatprep.subr.mxu0 0.0
    %747 = vmatpush1.msra.mxu0 0.0
    %748 = vmatprep.subr.mxu0 0.0
    %749 = vmatpush1.msra.mxu0 0.0
    %750 = vmatprep.subr.mxu0 0.0
    %751 = vmatpush1.msra.mxu0 0.0
    %752 = vmatprep.subr.mxu0 0.0
    %753 = vmatpush1.msra.mxu0 0.0
    %754 = vmatprep.subr.mxu0 0.0
    %755 = vmatpush1.msra.mxu0 0.0
    %756 = vmatprep.subr.mxu0 0.0
    %757 = vmatpush1.msra.mxu0 0.0
    %758 = vmatprep.subr.mxu0 0.0
    %759 = vmatpush1.msra.mxu0 0.0
    %760 = vmatprep.mubr.f32.mxu0 0.0
    %761 = vmatmul.mubr.f32.gmra.mrb[0].mxu0 %v689
    %v762 = vpop.f32.mrb[0].mxu0
    %v763 = vadd.f32 0.0, %v762
    %v764 = vpop.f32.mrb[0].mxu0
    %765 = vmatprep.mubr.f32.mxu0 0.0
    %766 = vmatmul.mubr.f32.gmra.mrb[0].mxu0 %v691
    %v767 = vpop.f32.mrb[0].mxu0
    %v768 = vadd.f32 0.0, %v767
    %v769 = vpop.f32.mrb[0].mxu0
    %770 = vmatprep.mubr.f32.mxu0 0.0
    %771 = vmatmul.mubr.f32.gmra.mrb[0].mxu0 %v693
    %v772 = vpop.f32.mrb[0].mxu0
    %v773 = vadd.f32 0.0, %v772
    %v774 = vpop.f32.mrb[0].mxu0
    %775 = vmatprep.mubr.f32.mxu0 0.0
    %776 = vmatmul.mubr.f32.gmra.mrb[0].mxu0 %v695
    %v777 = vpop.f32.mrb[0].mxu0
    %v778 = vadd.f32 0.0, %v777
    %v779 = vpop.f32.mrb[0].mxu0
    %780 = vdwg.mxu0
    %v781 = vmax.f32 %v763, 1e-30
    %v782 = vmax.f32 %v768, 1e-30
    %v783 = vmax.f32 %v773, 1e-30
    %v784 = vmax.f32 %v778, 1e-30
    %v785 = vsel %vm667, %v781, 1.0
    %v786 = vsel %vm667, %v782, 1.0
    %v787 = vsel %vm667, %v783, 1.0
    %v788 = vsel %vm667, %v784, 1.0
    %v789 = vrcp.pop %v785
    %v790 = vrcp.pop %v786
    %v791 = vrcp.pop %v787
    %v792 = vrcp.pop %v788
    %v793 = vmul.f32 %v785, %v789
    %v794 = vmul.f32 %v786, %v790
    %v795 = vmul.f32 %v787, %v791
    %v796 = vmul.f32 %v788, %v792
    %v797 = vsub.f32 2.0, %v793
    %v798 = vsub.f32 2.0, %v794
    %v799 = vsub.f32 2.0, %v795
    %v800 = vsub.f32 2.0, %v796
    %v801 = vmul.f32 %v789, %v797
    %v802 = vmul.f32 %v790, %v798
    %v803 = vmul.f32 %v791, %v799
    %v804 = vmul.f32 %v792, %v800
    %v805 = vmul.f32 %v689, %v801
    %v806 = vmul.f32 %v691, %v802
    %v807 = vmul.f32 %v693, %v803
    %v808 = vmul.f32 %v695, %v804
    %v809 = vsel %vm667, %v805, %v631
    %v810 = vsel %vm667, %v806, %v636
    %v811 = vsel %vm667, %v807, %v641
    %v812 = vsel %vm667, %v808, %v646
    %813 = vst [vmem:[#allocation2] sm:$0xff] %v809
    %814 = vst [vmem:[#allocation2 + $0x8] sm:$0xff] %v810
    %815 = vst [vmem:[#allocation2 + $0x10] sm:$0xff] %v811
    %816 = vst [vmem:[#allocation2 + $0x18] sm:$0xff] %v812
    // Predicated region
    $region50: #{tpu_custom_call.1} parent=1 // pred_check
      _
    $region51: #{tpu_custom_call.1} parent=1 // pred_check_branch
      %818 = sbr.rel (0) target = $region53
    $region52: #{tpu_custom_call.1} parent=1 // pred_region
      %s820 = ssub.s32 512, 512
      %821 = vsyncadd [#allocation3], %s820
      %s822 = sshll.u32 [#allocation2], 4
      %s823 = int_to_ptr.vmem [resolvable:$true] %s822
      %828 = dma.vmem_to_hbm [thread:$0]  %s823, 512, %s12, [#allocation3], 128, 128, 8
    $region53: #{tpu_custom_call.1} parent=1 // pred_fallthru
      _
    // Predicated region
    $region54: #{tpu_custom_call.1} parent=1 // pred_check
      _
    $region55: #{tpu_custom_call.1} parent=1 // pred_check_branch
      %830 = sbr.rel (0) target = $region57
    $region56: #{tpu_custom_call.1} parent=1 // pred_region
      %831 = dma.done [#allocation3], 512
    $region57: #{tpu_custom_call.1} parent=1 // pred_fallthru
      _
    %832 = vsyncpa [#allocation3], 1

</llo_original>
